<compile_context>
chip_gen: v7x
topology: tpu7x:2x2x1
jax: 0.10.0
libtpu: 0.0.40
codegen_flags: <defaults>
</compile_context>

<pallas_src>
import jax
import jax.numpy as jnp
from jax.experimental import pallas as pl
from jax.experimental.pallas import tpu as pltpu

LANE = 128
SUBLANE_F32 = 8
SUBLANE_BF16 = 16


def _round_up(n, m):
    return (n + m - 1) // m * m


def policy_kernel(x_ref, w1_ref, b1_ref, w2_ref, b2_ref, w3_ref, b3_ref, out_ref):
    x = x_ref[...]
    # Layer 1: Linear + ReLU.  K = f_in is tiny (4); Mosaic pads the matmul
    # operands in-register, so no HBM padding is needed.  (A VPU broadcast-FMA
    # alternative was considered but skipped: the kernel is HBM-bound.)
    h = jnp.dot(x, w1_ref[...], preferred_element_type=jnp.float32)
    h = jnp.maximum(h + b1_ref[...], 0.0)
    # Layer 2: Linear + ReLU.
    h = jnp.dot(h.astype(w2_ref.dtype), w2_ref[...], preferred_element_type=jnp.float32)
    h = jnp.maximum(h + b2_ref[...], 0.0)
    # Layer 3: Linear + softmax over the real (unpadded) action axis.
    logits = (
        jnp.dot(h.astype(w3_ref.dtype), w3_ref[...], preferred_element_type=jnp.float32)
        + b3_ref[...]
    )
    m = jnp.max(logits, axis=-1, keepdims=True)
    e = jnp.exp(logits - m)
    denom = jnp.sum(e, axis=-1, keepdims=True)
    # Exact reciprocal (not approx) so the 1e-5 sum-to-1 / allclose checks hold.
    out_ref[...] = (e * pl.reciprocal(denom)).astype(out_ref.dtype)


def policy_forward(x, params, *, block_batch=4096, compute_dtype=jnp.float32,
                   vmem_budget_bytes=None):
    """Fused policy forward pass.

    x: (B, F_in) float32.  params: list of (W, b), W is (in, out), b is (1, out).
    Returns (B, n_actions) float32 probabilities.

    compute_dtype=jnp.bfloat16 halves x / weight DMA (accumulation, softmax and
    output stay f32); f32 default preserves 1e-5 accuracy.
    """
    (w1, b1), (w2, b2), (w3, b3) = params
    B, f_in = x.shape
    h1, h2, n_out = w1.shape[1], w2.shape[1], w3.shape[1]
    itm = jnp.dtype(compute_dtype).itemsize
    sub = SUBLANE_BF16 if itm < 4 else SUBLANE_F32

    # ---- scoped-VMEM budget.  Conservative 32 MiB works on every generation
    # (v7x: 64 MiB physical per TC); raise to 64 MiB on chips that report
    # large VMEM (v5e/v6e: 128 MiB physical).
    if vmem_budget_bytes is None:
        vmem_budget_bytes = 32 * 1024 * 1024
        try:
            if pltpu.get_tpu_info().vmem_capacity_bytes >= 96 * 1024 * 1024:
                vmem_budget_bytes = 64 * 1024 * 1024
        except Exception:
            pass  # keep the conservative default

    def lanes(d):
        return _round_up(max(d, 1), LANE)

    # Per-batch-row VMEM bytes, accounting for (sublane, 128-lane) layout
    # padding: the (tb, f_in) x tile is stored 128 lanes wide, and the
    # Mosaic-materialized intermediates h1 / h2 / logits / e are f32.
    per_row = (
        2 * lanes(f_in) * itm                               # x tile, double-buffered
        + 2 * lanes(n_out) * 4                              # out tile, double-buffered
        + (lanes(h1) + lanes(h2) + 2 * lanes(n_out)) * 4    # h1, h2, logits, e
    )
    # Resident (double-buffered) weights + biases, layout padded.
    fixed = 2 * (
        (_round_up(f_in, sub) * lanes(h1)
         + _round_up(h1, sub) * lanes(h2)
         + _round_up(h2, sub) * lanes(n_out)) * itm
        + (lanes(h1) + lanes(h2) + lanes(n_out)) * 8 * 4
    )
    headroom = vmem_budget_bytes - fixed - (2 << 20)        # slack for Mosaic scratch
    tb_cap = max(sub, (headroom // per_row) // sub * sub)

    # ---- batch tile: biggest that fits the budget, but keep >=2 grid steps
    # when B allows it so the "parallel" axis feeds both v7x TensorCores.
    tb = min(block_batch, tb_cap)
    tb = min(tb, _round_up(pl.cdiv(B, 2), sub))
    tb = max(sub, min(tb, _round_up(B, sub)))
    tb = _round_up(tb, sub)
    assert tb * per_row + fixed <= vmem_budget_bytes, "batch tile exceeds VMEM budget"

    b_pad = _round_up(B, tb)
    grid = (b_pad // tb,)

    xp = jnp.pad(x, ((0, b_pad - B), (0, 0))).astype(compute_dtype)
    w1c, w2c, w3c = (w.astype(compute_dtype) for w in (w1, w2, w3))
    b1c, b2c, b3c = (b.astype(jnp.float32) for b in (b1, b2, b3))

    const = lambda i: (0, 0)  # constant block index -> weights stay VMEM-resident
    out_p = pl.pallas_call(
        policy_kernel,
        out_shape=jax.ShapeDtypeStruct((b_pad, n_out), jnp.float32),
        grid=grid,
        in_specs=[
            pl.BlockSpec((tb, f_in), lambda i: (i, 0)),
            pl.BlockSpec((f_in, h1), const),
            pl.BlockSpec((1, h1), const),
            pl.BlockSpec((h1, h2), const),
            pl.BlockSpec((1, h2), const),
            pl.BlockSpec((h2, n_out), const),
            pl.BlockSpec((1, n_out), const),
        ],
        out_specs=pl.BlockSpec((tb, n_out), lambda i: (i, 0)),
        compiler_params=pltpu.CompilerParams(
            dimension_semantics=("parallel",),   # shard batch tiles across TCs (v7x)
            vmem_limit_bytes=vmem_budget_bytes,
        ),
    )(xp, w1c, b1c, w2c, b2c, w3c, b3c)

    # Drop batch padding.  Zero-padded rows produce valid (finite) softmax rows
    # and are simply discarded here.
    return out_p[:B, :]


def init_params(layer_sizes, key):
    """Deterministic init mimicking PyTorch Linear's uniform(-1/sqrt(fan_in), +)."""
    params = []
    for i in range(len(layer_sizes) - 1):
        fan_in, fan_out = layer_sizes[i], layer_sizes[i + 1]
        key, kw, kb = jax.random.split(key, 3)
        bound = 1.0 / jnp.sqrt(jnp.float32(fan_in))
        w = jax.random.uniform(kw, (fan_in, fan_out), jnp.float32, -bound, bound)
        b = jax.random.uniform(kb, (1, fan_out), jnp.float32, -bound, bound)
        params.append((w, b))
    return params


def policy_ref(x, params):
    h = x
    n = len(params)
    for i, (w, b) in enumerate(params):
        h = h @ w + b
        if i < n - 1:
            h = jnp.maximum(h, 0.0)
    return jax.nn.softmax(h, axis=-1)


# TODO(synk): Policy.act() (Categorical sampling + log_prob) is host-side RL
# control flow and is intentionally not part of the fused forward kernel.

if __name__ == "__main__":
    # Forward-consistent small shapes: state_dim=4, hidden=32, n_actions=2.
    layer_sizes = [4, 32, 32, 2]

    key = jax.random.PRNGKey(0)
    key, kx = jax.random.split(key)
    params = init_params(layer_sizes, key)

    # 1) Primary small test (batch=2, single grid step).
    x = jax.random.normal(kx, (2, layer_sizes[0]), jnp.float32)
    probs = policy_forward(x, params)
    jax.block_until_ready(probs)
    ref = policy_ref(x, params)
    assert probs.shape == (2, layer_sizes[-1])
    assert jnp.allclose(probs, ref, atol=1e-5, rtol=1e-5)
    assert jnp.allclose(jnp.sum(probs, axis=-1), 1.0, atol=1e-5)

    # 2) Multi-grid-step test: 48 rows, 16-row tiles -> 3 grid steps,
    #    exercising the pipeline, resident weights and narrow output stores.
    key, kx2 = jax.random.split(key)
    x2 = jax.random.normal(kx2, (48, layer_sizes[0]), jnp.float32)
    probs2 = policy_forward(x2, params, block_batch=16)
    jax.block_until_ready(probs2)
    ref2 = policy_ref(x2, params)
    assert jnp.allclose(probs2, ref2, atol=1e-5, rtol=1e-5)
    assert jnp.allclose(jnp.sum(probs2, axis=-1), 1.0, atol=1e-5)

    # 3) Default-path test: B=300 with auto tiling -> tile capped at ceil(B/2)
    #    (2 grid steps, last tile partially padded).
    key, kx3 = jax.random.split(key)
    x3 = jax.random.normal(kx3, (300, layer_sizes[0]), jnp.float32)
    probs3 = policy_forward(x3, params)
    jax.block_until_ready(probs3)
    ref3 = policy_ref(x3, params)
    assert jnp.allclose(probs3, ref3, atol=1e-5, rtol=1e-5)
    assert jnp.allclose(jnp.sum(probs3, axis=-1), 1.0, atol=1e-5)

    # 4) bf16 compute path (f32 accumulate + f32 softmax): relaxed tolerance,
    #    but row sums stay exact to f32 precision.
    probs4 = policy_forward(x3, params, compute_dtype=jnp.bfloat16)
    jax.block_until_ready(probs4)
    assert jnp.allclose(probs4, ref3, atol=5e-2, rtol=5e-2)
    assert jnp.allclose(jnp.sum(probs4, axis=-1), 1.0, atol=1e-5)

    print("KERNEL_OK")
</pallas_src>

<mosaic_0001>
module attributes {stable_mosaic.version = 11 : i64} {
  func.func @policy_kernel(%arg0: i32, %arg1: memref<8x4xf32, #tpu.memory_space<vmem>>, %arg2: memref<4x32xf32, #tpu.memory_space<vmem>>, %arg3: memref<1x32xf32, #tpu.memory_space<vmem>>, %arg4: memref<32x32xf32, #tpu.memory_space<vmem>>, %arg5: memref<1x32xf32, #tpu.memory_space<vmem>>, %arg6: memref<32x2xf32, #tpu.memory_space<vmem>>, %arg7: memref<1x2xf32, #tpu.memory_space<vmem>>, %arg8: memref<8x2xf32, #tpu.memory_space<vmem>>) attributes {dimension_semantics = [#tpu.dimension_semantics<parallel>], iteration_bounds = array<i64: 1>, scalar_prefetch = 0 : i64, scratch_operands = 0 : i64, tpu.core_type = #tpu.core_type<tc>, window_params = [{transform_indices = @transform_0, window_bounds = array<i64: 8, 4>}, {pipeline_mode = #tpu.pipeline_mode<synchronous>, transform_indices = @transform_1, window_bounds = array<i64: 4, 32>}, {pipeline_mode = #tpu.pipeline_mode<synchronous>, transform_indices = @transform_2, window_bounds = array<i64: 1, 32>}, {pipeline_mode = #tpu.pipeline_mode<synchronous>, transform_indices = @transform_3, window_bounds = array<i64: 32, 32>}, {pipeline_mode = #tpu.pipeline_mode<synchronous>, transform_indices = @transform_4, window_bounds = array<i64: 1, 32>}, {pipeline_mode = #tpu.pipeline_mode<synchronous>, transform_indices = @transform_5, window_bounds = array<i64: 32, 2>}, {pipeline_mode = #tpu.pipeline_mode<synchronous>, transform_indices = @transform_6, window_bounds = array<i64: 1, 2>}, {transform_indices = @transform_7, window_bounds = array<i64: 8, 2>}]} {
    %c0 = arith.constant 0 : index
    %c0_0 = arith.constant 0 : index
    %0 = vector.load %arg1[%c0, %c0_0] : memref<8x4xf32, #tpu.memory_space<vmem>>, vector<8x4xf32>
    %c0_1 = arith.constant 0 : index
    %c0_2 = arith.constant 0 : index
    %1 = vector.load %arg2[%c0_1, %c0_2] : memref<4x32xf32, #tpu.memory_space<vmem>>, vector<4x32xf32>
    %cst = arith.constant dense<0.000000e+00> : vector<8x32xf32>
    %2 = tpu.matmul %0, %1, %cst {dimension_numbers = #tpu.dot_dimension_numbers<[1], [0], [0], [1], [0, 0, 1, 1], [], []>} : vector<8x4xf32>, vector<4x32xf32>, vector<8x32xf32> -> vector<8x32xf32>
    %c0_3 = arith.constant 0 : index
    %c0_4 = arith.constant 0 : index
    %3 = vector.load %arg3[%c0_3, %c0_4] : memref<1x32xf32, #tpu.memory_space<vmem>>, vector<1x32xf32>
    %4 = vector.broadcast %3 : vector<1x32xf32> to vector<8x32xf32>
    %5 = arith.addf %2, %4 : vector<8x32xf32>
    %cst_5 = arith.constant 0.000000e+00 : f32
    %6 = vector.broadcast %cst_5 : f32 to vector<8x32xf32>
    %7 = arith.maximumf %5, %6 : vector<8x32xf32>
    %c0_6 = arith.constant 0 : index
    %c0_7 = arith.constant 0 : index
    %8 = vector.load %arg4[%c0_6, %c0_7] : memref<32x32xf32, #tpu.memory_space<vmem>>, vector<32x32xf32>
    %cst_8 = arith.constant dense<0.000000e+00> : vector<8x32xf32>
    %9 = tpu.matmul %7, %8, %cst_8 {dimension_numbers = #tpu.dot_dimension_numbers<[1], [0], [0], [1], [0, 0, 1, 1], [], []>} : vector<8x32xf32>, vector<32x32xf32>, vector<8x32xf32> -> vector<8x32xf32>
    %c0_9 = arith.constant 0 : index
    %c0_10 = arith.constant 0 : index
    %10 = vector.load %arg5[%c0_9, %c0_10] : memref<1x32xf32, #tpu.memory_space<vmem>>, vector<1x32xf32>
    %11 = vector.broadcast %10 : vector<1x32xf32> to vector<8x32xf32>
    %12 = arith.addf %9, %11 : vector<8x32xf32>
    %cst_11 = arith.constant 0.000000e+00 : f32
    %13 = vector.broadcast %cst_11 : f32 to vector<8x32xf32>
    %14 = arith.maximumf %12, %13 : vector<8x32xf32>
    %c0_12 = arith.constant 0 : index
    %c0_13 = arith.constant 0 : index
    %15 = vector.load %arg6[%c0_12, %c0_13] : memref<32x2xf32, #tpu.memory_space<vmem>>, vector<32x2xf32>
    %cst_14 = arith.constant dense<0.000000e+00> : vector<8x2xf32>
    %16 = tpu.matmul %14, %15, %cst_14 {dimension_numbers = #tpu.dot_dimension_numbers<[1], [0], [0], [1], [0, 0, 1, 1], [], []>} : vector<8x32xf32>, vector<32x2xf32>, vector<8x2xf32> -> vector<8x2xf32>
    %c0_15 = arith.constant 0 : index
    %c0_16 = arith.constant 0 : index
    %17 = vector.load %arg7[%c0_15, %c0_16] : memref<1x2xf32, #tpu.memory_space<vmem>>, vector<1x2xf32>
    %18 = vector.broadcast %17 : vector<1x2xf32> to vector<8x2xf32>
    %19 = arith.addf %16, %18 : vector<8x2xf32>
    %cst_17 = arith.constant dense<0xFF800000> : vector<8xf32>
    %20 = vector.multi_reduction <maximumf>, %19, %cst_17 [1] : vector<8x2xf32> to vector<8xf32>
    %21 = vector.shape_cast %20 : vector<8xf32> to vector<8x1xf32>
    %22 = vector.broadcast %21 : vector<8x1xf32> to vector<8x2xf32>
    %23 = arith.subf %19, %22 : vector<8x2xf32>
    %24 = math.exp %23 : vector<8x2xf32>
    %cst_18 = arith.constant dense<0.000000e+00> : vector<8xf32>
    %25 = vector.multi_reduction <add>, %24, %cst_18 [1] : vector<8x2xf32> to vector<8xf32>
    %26 = vector.shape_cast %25 : vector<8xf32> to vector<8x1xf32>
    %27 = tpu.reciprocal %26 : vector<8x1xf32> -> vector<8x1xf32>
    %28 = vector.broadcast %27 : vector<8x1xf32> to vector<8x2xf32>
    %29 = arith.mulf %24, %28 : vector<8x2xf32>
    %c0_19 = arith.constant 0 : index
    %c0_20 = arith.constant 0 : index
    %30 = vector.load %arg8[%c0_19, %c0_20] : memref<8x2xf32, #tpu.memory_space<vmem>>, vector<8x2xf32>
    tpu.vector_store %arg8[%c0_19, %c0_20], %29 {strides = array<i32>} : memref<8x2xf32, #tpu.memory_space<vmem>>, vector<8x2xf32>,
    return
  }
  func.func @transform_0(%arg0: i32) -> (i32, i32) {
    %c0_i32 = arith.constant 0 : i32
    %c0_i32_0 = arith.constant 0 : i32
    return %arg0, %c0_i32 : i32, i32
  }
  func.func @transform_1(%arg0: i32) -> (i32, i32) {
    %c0_i32 = arith.constant 0 : i32
    %c0_i32_0 = arith.constant 0 : i32
    %c0_i32_1 = arith.constant 0 : i32
    return %c0_i32, %c0_i32_0 : i32, i32
  }
  func.func @transform_2(%arg0: i32) -> (i32, i32) {
    %c0_i32 = arith.constant 0 : i32
    %c0_i32_0 = arith.constant 0 : i32
    %c0_i32_1 = arith.constant 0 : i32
    return %c0_i32, %c0_i32_0 : i32, i32
  }
  func.func @transform_3(%arg0: i32) -> (i32, i32) {
    %c0_i32 = arith.constant 0 : i32
    %c0_i32_0 = arith.constant 0 : i32
    %c0_i32_1 = arith.constant 0 : i32
    return %c0_i32, %c0_i32_0 : i32, i32
  }
  func.func @transform_4(%arg0: i32) -> (i32, i32) {
    %c0_i32 = arith.constant 0 : i32
    %c0_i32_0 = arith.constant 0 : i32
    %c0_i32_1 = arith.constant 0 : i32
    return %c0_i32, %c0_i32_0 : i32, i32
  }
  func.func @transform_5(%arg0: i32) -> (i32, i32) {
    %c0_i32 = arith.constant 0 : i32
    %c0_i32_0 = arith.constant 0 : i32
    %c0_i32_1 = arith.constant 0 : i32
    return %c0_i32, %c0_i32_0 : i32, i32
  }
  func.func @transform_6(%arg0: i32) -> (i32, i32) {
    %c0_i32 = arith.constant 0 : i32
    %c0_i32_0 = arith.constant 0 : i32
    %c0_i32_1 = arith.constant 0 : i32
    return %c0_i32, %c0_i32_0 : i32, i32
  }
  func.func @transform_7(%arg0: i32) -> (i32, i32) {
    %c0_i32 = arith.constant 0 : i32
    %c0_i32_0 = arith.constant 0 : i32
    return %arg0, %c0_i32 : i32, i32
  }
}

</mosaic_0001>

<llo_original>
// kernel: tpu_custom_call.1
$region0: #{tpu_custom_call.1}
  #allocation0 [shape = 'u32[]', space=smem, size = 0x4, offset = 0x4, fixed_abs, tag = 'smem constant byte address 0x4 - core index']
  #allocation1 [shape = 'u32[144,128]{1,0:T(1,128)}', space=vmem, size = 0x12000, scoped, tag = 'internal scratch']
  %s0 = inlined_call_operand.vmem [shape: f32[8,4], index: 0, kind: input, shape index: {}]
  %s1 = inlined_call_operand.vmem [shape: f32[4,32], index: 1, kind: input, shape index: {}]
  %s2 = inlined_call_operand.vmem [shape: f32[1,32], index: 2, kind: input, shape index: {}]
  %s3 = inlined_call_operand.vmem [shape: f32[32,32], index: 3, kind: input, shape index: {}]
  %s4 = inlined_call_operand.vmem [shape: f32[1,32], index: 4, kind: input, shape index: {}]
  %s5 = inlined_call_operand.vmem [shape: f32[32,2], index: 5, kind: input, shape index: {}]
  %s6 = inlined_call_operand.vmem [shape: f32[1,2], index: 6, kind: input, shape index: {}]
  %s7 = inlined_call_operand.vmem [shape: f32[8,2], index: 7, kind: output, shape index: {}]
  %s8 = sld [smem:[#allocation0]]
  $region38: #{tpu_custom_call.1} parent=0
    _
  %s10 = ssub.s32 1, %s8
  %s11 = scalar_select 0, %s10, %s8
  // Predicated region
  $region2: #{tpu_custom_call.1} parent=0 // pred_check
    _
  $region3: #{tpu_custom_call.1} parent=0 // pred_check_branch
    %13 = sbr.rel (0) target = $region5
  $region4: #{tpu_custom_call.1} parent=0 // pred_region
    _
  $region5: #{tpu_custom_call.1} parent=0 // pred_fallthru
    _
  // Predicated region
  $region6: #{tpu_custom_call.1} parent=0 // pred_check
    _
  $region7: #{tpu_custom_call.1} parent=0 // pred_check_branch
    %15 = sbr.rel (0) target = $region9
  $region8: #{tpu_custom_call.1} parent=0 // pred_region
    _
  $region9: #{tpu_custom_call.1} parent=0 // pred_fallthru
    _
  // Predicated region
  $region10: #{tpu_custom_call.1} parent=0 // pred_check
    _
  $region11: #{tpu_custom_call.1} parent=0 // pred_check_branch
    %17 = sbr.rel (0) target = $region13
  $region12: #{tpu_custom_call.1} parent=0 // pred_region
    _
  $region13: #{tpu_custom_call.1} parent=0 // pred_fallthru
    _
  // Predicated region
  $region14: #{tpu_custom_call.1} parent=0 // pred_check
    _
  $region15: #{tpu_custom_call.1} parent=0 // pred_check_branch
    %19 = sbr.rel (0) target = $region17
  $region16: #{tpu_custom_call.1} parent=0 // pred_region
    _
  $region17: #{tpu_custom_call.1} parent=0 // pred_fallthru
    _
  // Predicated region
  $region18: #{tpu_custom_call.1} parent=0 // pred_check
    _
  $region19: #{tpu_custom_call.1} parent=0 // pred_check_branch
    %21 = sbr.rel (0) target = $region21
  $region20: #{tpu_custom_call.1} parent=0 // pred_region
    _
  $region21: #{tpu_custom_call.1} parent=0 // pred_fallthru
    _
  // Predicated region
  $region22: #{tpu_custom_call.1} parent=0 // pred_check
    _
  $region23: #{tpu_custom_call.1} parent=0 // pred_check_branch
    %23 = sbr.rel (0) target = $region25
  $region24: #{tpu_custom_call.1} parent=0 // pred_region
    _
  $region25: #{tpu_custom_call.1} parent=0 // pred_fallthru
    _
  // Predicated region
  $region26: #{tpu_custom_call.1} parent=0 // pred_check
    _
  $region27: #{tpu_custom_call.1} parent=0 // pred_check_branch
    %25 = sbr.rel (0) target = $region29
  $region28: #{tpu_custom_call.1} parent=0 // pred_region
    _
  $region29: #{tpu_custom_call.1} parent=0 // pred_fallthru
    _
  %v26 = vld [vmem:[%s0] sm:$0xff]
  %v27 = vld [vmem:[%s1] sm:$0xf]
  %v28 = vld [vmem:[%s2] sm:$0x1]
  %v30 = vlaneseq
  %v31 = vshrl.u32 %v30, 7
  %v32 = vsub.s32 0, %v31
  %v33 = vrot.slane %v28, %v32
  %vm35 = vcmask 31744
  %v37 = vsel %vm35, %v26, 0
  %vm39 = vcmask 1043456
  %v41 = vsel %vm39, %v27, 0
  %43 = vmatprep.subr.mxu0 0.0
  %44 = vmatpush1.msra.mxu0 %v41
  %45 = vmatprep.subr.mxu0 0.0
  %46 = vmatpush1.msra.mxu0 0.0
  %47 = vmatprep.subr.mxu0 0.0
  %48 = vmatpush1.msra.mxu0 0.0
  %49 = vmatprep.subr.mxu0 0.0
  %50 = vmatpush1.msra.mxu0 0.0
  %51 = vmatprep.subr.mxu0 0.0
  %52 = vmatpush1.msra.mxu0 0.0
  %53 = vmatprep.subr.mxu0 0.0
  %54 = vmatpush1.msra.mxu0 0.0
  %55 = vmatprep.subr.mxu0 0.0
  %56 = vmatpush1.msra.mxu0 0.0
  %57 = vmatprep.subr.mxu0 0.0
  %58 = vmatpush1.msra.mxu0 0.0
  %59 = vmatprep.subr.mxu0 0.0
  %60 = vmatpush1.msra.mxu0 0.0
  %61 = vmatprep.subr.mxu0 0.0
  %62 = vmatpush1.msra.mxu0 0.0
  %63 = vmatprep.subr.mxu0 0.0
  %64 = vmatpush1.msra.mxu0 0.0
  %65 = vmatprep.subr.mxu0 0.0
  %66 = vmatpush1.msra.mxu0 0.0
  %67 = vmatprep.subr.mxu0 0.0
  %68 = vmatpush1.msra.mxu0 0.0
  %69 = vmatprep.subr.mxu0 0.0
  %70 = vmatpush1.msra.mxu0 0.0
  %71 = vmatprep.subr.mxu0 0.0
  %72 = vmatpush1.msra.mxu0 0.0
  %73 = vmatprep.subr.mxu0 0.0
  %74 = vmatpush1.msra.mxu0 0.0
  %75 = vmatprep.subr.mxu0 0.0
  %76 = vmatpush1.msra.mxu0 0.0
  %77 = vmatprep.subr.mxu0 0.0
  %78 = vmatpush1.msra.mxu0 0.0
  %79 = vmatprep.subr.mxu0 0.0
  %80 = vmatpush1.msra.mxu0 0.0
  %81 = vmatprep.subr.mxu0 0.0
  %82 = vmatpush1.msra.mxu0 0.0
  %83 = vmatprep.subr.mxu0 0.0
  %84 = vmatpush1.msra.mxu0 0.0
  %85 = vmatprep.subr.mxu0 0.0
  %86 = vmatpush1.msra.mxu0 0.0
  %87 = vmatprep.subr.mxu0 0.0
  %88 = vmatpush1.msra.mxu0 0.0
  %89 = vmatprep.subr.mxu0 0.0
  %90 = vmatpush1.msra.mxu0 0.0
  %91 = vmatprep.subr.mxu0 0.0
  %92 = vmatpush1.msra.mxu0 0.0
  %93 = vmatprep.subr.mxu0 0.0
  %94 = vmatpush1.msra.mxu0 0.0
  %95 = vmatprep.subr.mxu0 0.0
  %96 = vmatpush1.msra.mxu0 0.0
  %97 = vmatprep.subr.mxu0 0.0
  %98 = vmatpush1.msra.mxu0 0.0
  %99 = vmatprep.subr.mxu0 0.0
  %100 = vmatpush1.msra.mxu0 0.0
  %101 = vmatprep.subr.mxu0 0.0
  %102 = vmatpush1.msra.mxu0 0.0
  %103 = vmatprep.subr.mxu0 0.0
  %104 = vmatpush1.msra.mxu0 0.0
  %105 = vmatprep.subr.mxu0 0.0
  %106 = vmatpush1.msra.mxu0 0.0
  %107 = vmatprep.mubr.f32.mxu0 0.0
  %108 = vmatmul.mubr.f32.gmra.mrb[0].mxu0 %v37
  %v109 = vpop.f32.mrb[0].mxu0
  %v110 = vadd.f32 %v33, %v109
  %v111 = vpop.f32.mrb[0].mxu0
  %112 = vdwg.mxu0
  %v113 = vmax.f32 %v110, 0.0
  %v114 = vld [vmem:[%s3] sm:$0xff]
  %v115 = vld [vmem:[%s3 + $0x8] sm:$0xff]
  %v116 = vld [vmem:[%s3 + $0x10] sm:$0xff]
  %v117 = vld [vmem:[%s3 + $0x18] sm:$0xff]
  %v118 = vld [vmem:[%s4] sm:$0x1]
  %v120 = vlaneseq
  %v121 = vshrl.u32 %v120, 7
  %v122 = vsub.s32 0, %v121
  %v123 = vrot.slane %v118, %v122
  %vm125 = vcmask 261120
  %v127 = vsel %vm125, %v113, 0
  %129 = vmatprep.subr.mxu0 0.0
  %130 = vmatpush1.msra.mxu0 %v114
  %131 = vmatprep.subr.mxu0 0.0
  %132 = vmatpush1.msra.mxu0 %v115
  %133 = vmatprep.subr.mxu0 0.0
  %134 = vmatpush1.msra.mxu0 %v116
  %135 = vmatprep.subr.mxu0 0.0
  %136 = vmatpush1.msra.mxu0 %v117
  %137 = vmatprep.subr.mxu0 0.0
  %138 = vmatpush1.msra.mxu0 0.0
  %139 = vmatprep.subr.mxu0 0.0
  %140 = vmatpush1.msra.mxu0 0.0
  %141 = vmatprep.subr.mxu0 0.0
  %142 = vmatpush1.msra.mxu0 0.0
  %143 = vmatprep.subr.mxu0 0.0
  %144 = vmatpush1.msra.mxu0 0.0
  %145 = vmatprep.subr.mxu0 0.0
  %146 = vmatpush1.msra.mxu0 0.0
  %147 = vmatprep.subr.mxu0 0.0
  %148 = vmatpush1.msra.mxu0 0.0
  %149 = vmatprep.subr.mxu0 0.0
  %150 = vmatpush1.msra.mxu0 0.0
  %151 = vmatprep.subr.mxu0 0.0
  %152 = vmatpush1.msra.mxu0 0.0
  %153 = vmatprep.subr.mxu0 0.0
  %154 = vmatpush1.msra.mxu0 0.0
  %155 = vmatprep.subr.mxu0 0.0
  %156 = vmatpush1.msra.mxu0 0.0
  %157 = vmatprep.subr.mxu0 0.0
  %158 = vmatpush1.msra.mxu0 0.0
  %159 = vmatprep.subr.mxu0 0.0
  %160 = vmatpush1.msra.mxu0 0.0
  %161 = vmatprep.subr.mxu0 0.0
  %162 = vmatpush1.msra.mxu0 0.0
  %163 = vmatprep.subr.mxu0 0.0
  %164 = vmatpush1.msra.mxu0 0.0
  %165 = vmatprep.subr.mxu0 0.0
  %166 = vmatpush1.msra.mxu0 0.0
  %167 = vmatprep.subr.mxu0 0.0
  %168 = vmatpush1.msra.mxu0 0.0
  %169 = vmatprep.subr.mxu0 0.0
  %170 = vmatpush1.msra.mxu0 0.0
  %171 = vmatprep.subr.mxu0 0.0
  %172 = vmatpush1.msra.mxu0 0.0
  %173 = vmatprep.subr.mxu0 0.0
  %174 = vmatpush1.msra.mxu0 0.0
  %175 = vmatprep.subr.mxu0 0.0
  %176 = vmatpush1.msra.mxu0 0.0
  %177 = vmatprep.subr.mxu0 0.0
  %178 = vmatpush1.msra.mxu0 0.0
  %179 = vmatprep.subr.mxu0 0.0
  %180 = vmatpush1.msra.mxu0 0.0
  %181 = vmatprep.subr.mxu0 0.0
  %182 = vmatpush1.msra.mxu0 0.0
  %183 = vmatprep.subr.mxu0 0.0
  %184 = vmatpush1.msra.mxu0 0.0
  %185 = vmatprep.subr.mxu0 0.0
  %186 = vmatpush1.msra.mxu0 0.0
  %187 = vmatprep.subr.mxu0 0.0
  %188 = vmatpush1.msra.mxu0 0.0
  %189 = vmatprep.subr.mxu0 0.0
  %190 = vmatpush1.msra.mxu0 0.0
  %191 = vmatprep.subr.mxu0 0.0
  %192 = vmatpush1.msra.mxu0 0.0
  %193 = vmatprep.mubr.f32.mxu0 0.0
  %194 = vmatmul.mubr.f32.gmra.mrb[0].mxu0 %v127
  %v195 = vpop.f32.mrb[0].mxu0
  %v196 = vadd.f32 %v123, %v195
  %v197 = vpop.f32.mrb[0].mxu0
  %198 = vdwg.mxu0
  %v199 = vmax.f32 %v196, 0.0
  %v200 = vld [vmem:[%s5] sm:$0xff]
  %v201 = vld [vmem:[%s5 + $0x8] sm:$0xff]
  %v202 = vld [vmem:[%s5 + $0x10] sm:$0xff]
  %v203 = vld [vmem:[%s5 + $0x18] sm:$0xff]
  %v204 = vld [vmem:[%s6] sm:$0x1]
  %v206 = vlaneseq
  %v207 = vshrl.u32 %v206, 7
  %v208 = vsub.s32 0, %v207
  %v209 = vrot.slane %v204, %v208
  %v212 = vsel %vm125, %v199, 0
  %214 = vmatprep.subr.mxu0 0.0
  %215 = vmatpush1.msra.mxu0 %v200
  %216 = vmatprep.subr.mxu0 0.0
  %217 = vmatpush1.msra.mxu0 %v201
  %218 = vmatprep.subr.mxu0 0.0
  %219 = vmatpush1.msra.mxu0 %v202
  %220 = vmatprep.subr.mxu0 0.0
  %221 = vmatpush1.msra.mxu0 %v203
  %222 = vmatprep.subr.mxu0 0.0
  %223 = vmatpush1.msra.mxu0 0.0
  %224 = vmatprep.subr.mxu0 0.0
  %225 = vmatpush1.msra.mxu0 0.0
  %226 = vmatprep.subr.mxu0 0.0
  %227 = vmatpush1.msra.mxu0 0.0
  %228 = vmatprep.subr.mxu0 0.0
  %229 = vmatpush1.msra.mxu0 0.0
  %230 = vmatprep.subr.mxu0 0.0
  %231 = vmatpush1.msra.mxu0 0.0
  %232 = vmatprep.subr.mxu0 0.0
  %233 = vmatpush1.msra.mxu0 0.0
  %234 = vmatprep.subr.mxu0 0.0
  %235 = vmatpush1.msra.mxu0 0.0
  %236 = vmatprep.subr.mxu0 0.0
  %237 = vmatpush1.msra.mxu0 0.0
  %238 = vmatprep.subr.mxu0 0.0
  %239 = vmatpush1.msra.mxu0 0.0
  %240 = vmatprep.subr.mxu0 0.0
  %241 = vmatpush1.msra.mxu0 0.0
  %242 = vmatprep.subr.mxu0 0.0
  %243 = vmatpush1.msra.mxu0 0.0
  %244 = vmatprep.subr.mxu0 0.0
  %245 = vmatpush1.msra.mxu0 0.0
  %246 = vmatprep.subr.mxu0 0.0
  %247 = vmatpush1.msra.mxu0 0.0
  %248 = vmatprep.subr.mxu0 0.0
  %249 = vmatpush1.msra.mxu0 0.0
  %250 = vmatprep.subr.mxu0 0.0
  %251 = vmatpush1.msra.mxu0 0.0
  %252 = vmatprep.subr.mxu0 0.0
  %253 = vmatpush1.msra.mxu0 0.0
  %254 = vmatprep.subr.mxu0 0.0
  %255 = vmatpush1.msra.mxu0 0.0
  %256 = vmatprep.subr.mxu0 0.0
  %257 = vmatpush1.msra.mxu0 0.0
  %258 = vmatprep.subr.mxu0 0.0
  %259 = vmatpush1.msra.mxu0 0.0
  %260 = vmatprep.subr.mxu0 0.0
  %261 = vmatpush1.msra.mxu0 0.0
  %262 = vmatprep.subr.mxu0 0.0
  %263 = vmatpush1.msra.mxu0 0.0
  %264 = vmatprep.subr.mxu0 0.0
  %265 = vmatpush1.msra.mxu0 0.0
  %266 = vmatprep.subr.mxu0 0.0
  %267 = vmatpush1.msra.mxu0 0.0
  %268 = vmatprep.subr.mxu0 0.0
  %269 = vmatpush1.msra.mxu0 0.0
  %270 = vmatprep.subr.mxu0 0.0
  %271 = vmatpush1.msra.mxu0 0.0
  %272 = vmatprep.subr.mxu0 0.0
  %273 = vmatpush1.msra.mxu0 0.0
  %274 = vmatprep.subr.mxu0 0.0
  %275 = vmatpush1.msra.mxu0 0.0
  %276 = vmatprep.subr.mxu0 0.0
  %277 = vmatpush1.msra.mxu0 0.0
  %278 = vmatprep.mubr.f32.mxu0 0.0
  %279 = vmatmul.mubr.f32.gmra.mrb[0].mxu0 %v212
  %v280 = vpop.f32.mrb[0].mxu0
  %v281 = vadd.f32 %v209, %v280
  %v282 = vpop.f32.mrb[0].mxu0
  %283 = vdwg.mxu0
  %vm284 = vcmask 15360
  %v285 = vsel %vm284, %v281, -inf
  %286 = vmax.xlane.f32.xlu0 %v285
  %v287 = vpop.xlane.xlu0 %286
  %v288 = vsub.f32 %v281, %v287
  %v289 = vmul.f32 %v288, 1.442695
  %v290 = vpow.pop %v289
  %v291 = vsel %vm284, %v290, 0.0
  %292 = vadd.xlane.f32.xlu0 %v291
  %v293 = vpop.xlane.xlu0 %292
  %v294 = vrcp.pop %v293
  %v295 = vmul.f32 %v290, %v294
  %296 = vst.msk [vmem:[%s7] sm:$0xff] %vm284, %v295
  // Predicated region
  $region30: #{tpu_custom_call.1} parent=0 // pred_check
    _
  $region31: #{tpu_custom_call.1} parent=0 // pred_check_branch
    %298 = sbr.rel (0) target = $region33
  $region32: #{tpu_custom_call.1} parent=0 // pred_region
    _
  $region33: #{tpu_custom_call.1} parent=0 // pred_fallthru
    _
  // Predicated region
  $region34: #{tpu_custom_call.1} parent=0 // pred_check
    _
  $region35: #{tpu_custom_call.1} parent=0 // pred_check_branch
    %300 = sbr.rel (0) target = $region37
  $region36: #{tpu_custom_call.1} parent=0 // pred_region
    _
  $region37: #{tpu_custom_call.1} parent=0 // pred_fallthru
    _

</llo_original>
